<compile_context>
chip_gen: v6e
topology: v6e:2x2x1
jax: 0.10.0
libtpu: 0.0.40
codegen_flags: <defaults>
</compile_context>

<pallas_src>
import jax
import jax.numpy as jnp
from jax.experimental import pallas as pl
from jax.experimental.pallas import tpu as pltpu


def _softmax_dim1_kernel(x_ref, o_ref):
    # Block shape: (TB, C, TS, 128).  Softmax over axis=1 (channels).
    x = x_ref[...].astype(jnp.float32)
    m = jnp.max(x, axis=1, keepdims=True)
    e = jnp.exp(x - m)
    s = jnp.sum(e, axis=1, keepdims=True)
    # Exact divide: memory-bound kernel, so this is free and bit-accurate.
    o_ref[...] = (e / s).astype(o_ref.dtype)


def _round_up(a, b):
    return (a + b - 1) // b * b


def _vmem_capacity_bytes():
    try:
        return int(pltpu.get_tpu_info().vmem_capacity_bytes)
    except Exception:
        # Conservative fallback (v7x has 64 MiB per TensorCore).
        return 64 * 1024 * 1024


def softmax_dim1(x, *, tile_lanes=None):
    """Softmax over dim=1 of an NCHW tensor, matching nn.Softmax(dim=1)."""
    N, C, H, W = x.shape
    HW = H * W

    # ---- pad the flattened spatial axis to a multiple of 128 lanes -------
    HW_pad = _round_up(HW, 128)
    S = HW_pad // 128          # number of 128-lane columns

    # ---- per-generation VMEM budgets --------------------------------------
    vmem = _vmem_capacity_bytes()
    if vmem >= 96 * 1024 * 1024:          # v5e / v6e: 128 MiB VMEM
        max_block_f32 = 8 * 1024 * 1024
        vmem_limit = 96 * 1024 * 1024
    else:                                  # v7x: 64 MiB per TC
        max_block_f32 = 3 * 1024 * 1024
        vmem_limit = 56 * 1024 * 1024

    # Footprint per 128-lane column (one batch row, all channels), counted
    # in f32 so in-kernel f32 temporaries are budgeted alongside the
    # double-buffered in/out blocks.
    per_col_f32 = C * 128 * 4

    # ---- choose tile sizes -------------------------------------------------
    ts_budget = max(1, max_block_f32 // per_col_f32)
    if tile_lanes is not None:
        ts_budget = min(ts_budget, max(1, tile_lanes // 128))
    ts = min(S, ts_budget)
    if ts < S:
        # A sublane-axis block that does not cover the full extent must be a
        # multiple of 8.  (If C is so large that ts_budget < 8, this exceeds
        # the block budget a bit; vmem_limit has headroom for that.)
        ts = max(8, (ts // 8) * 8)
        if ts >= S:
            ts = S

    # Batch rows per block: spend whatever budget remains after ts.
    tb_budget = max(1, max_block_f32 // (per_col_f32 * ts))
    tb = min(N, tb_budget)
    while N % tb != 0:
        tb -= 1

    # Keep at least a few grid steps when the problem is big enough — grid
    # steps are what get sharded across v7x's 2 TensorCores and what the
    # double-buffer pipeline overlaps.
    min_block_f32 = 512 * 1024

    def _steps(tb_, ts_):
        return pl.cdiv(N, tb_) * pl.cdiv(S, ts_)

    while _steps(tb, ts) < 4 and tb * ts * per_col_f32 > min_block_f32:
        if tb > 1:
            tb = max(1, tb // 2)
            while N % tb != 0:
                tb -= 1
        elif ts > 8:
            ts = max(8, ((ts // 2) // 8) * 8)
        else:
            break

    # ---- pad (only if HW is not 128-aligned) & reshape ---------------------
    # TODO(synk): for HW % 128 != 0 the pad/slice below are extra HBM passes;
    # they could be moved into the kernel with a masked store on the last
    # 128-lane column.  The 128-aligned path below is completely pad-free.
    x3 = x.reshape(N, C, HW)
    if HW_pad != HW:
        # Zero padding is safe: softmax is independent per spatial position;
        # padded columns are sliced off afterwards.
        x3 = jnp.pad(x3, ((0, 0), (0, 0), (0, HW_pad - HW)))
    x4 = x3.reshape(N, C, S, 128)

    grid = (pl.cdiv(N, tb), pl.cdiv(S, ts))

    out4 = pl.pallas_call(
        _softmax_dim1_kernel,
        out_shape=jax.ShapeDtypeStruct((N, C, S, 128), x.dtype),
        grid_spec=pltpu.PrefetchScalarGridSpec(
            num_scalar_prefetch=0,
            grid=grid,
            in_specs=[pl.BlockSpec((tb, C, ts, 128),
                                   lambda n, t: (n, 0, t, 0))],
            out_specs=pl.BlockSpec((tb, C, ts, 128),
                                   lambda n, t: (n, 0, t, 0)),
        ),
        compiler_params=pltpu.CompilerParams(
            dimension_semantics=("parallel", "parallel"),
            vmem_limit_bytes=vmem_limit,
        ),
    )(x4)

    out3 = out4.reshape(N, C, HW_pad)
    if HW_pad != HW:
        out3 = out3[:, :, :HW]
    return out3.reshape(N, C, H, W)


def softmax_dim1_ref(x):
    return jax.nn.softmax(x, axis=1)


def _check(x, atol=5e-5, rtol=5e-5):
    out = jax.block_until_ready(softmax_dim1(x))
    ref = softmax_dim1_ref(x)
    assert out.shape == x.shape
    assert jnp.allclose(out, ref, atol=atol, rtol=rtol)
    assert jnp.allclose(jnp.sum(out, axis=1),
                        jnp.ones(out.shape[:1] + out.shape[2:]), atol=1e-4)


if __name__ == "__main__":
    key = jax.random.PRNGKey(0)

    # Primary test: the module's implied small NCHW shape.
    x = jax.random.normal(key, (2, 4, 16, 16), dtype=jnp.float32)
    _check(x)

    # Odd spatial extent -> exercises the lane padding path.
    k1, k2 = jax.random.split(key)
    x_odd = jax.random.normal(k1, (2, 4, 5, 7), dtype=jnp.float32)
    _check(x_odd)

    # Larger spatial extent (S not a multiple of 8) -> exercises boundary
    # masking / cdiv grid handling.
    x_big = jax.random.normal(k2, (1, 8, 32, 80), dtype=jnp.float32)
    _check(x_big)

    print("KERNEL_OK")
</pallas_src>

<mosaic_0001>
module attributes {stable_mosaic.version = 11 : i64} {
  func.func @_softmax_dim1_kernel(%arg0: i32, %arg1: i32, %arg2: memref<2x4x2x128xf32, #tpu.memory_space<vmem>>, %arg3: memref<2x4x2x128xf32, #tpu.memory_space<vmem>>) attributes {dimension_semantics = [#tpu.dimension_semantics<parallel>, #tpu.dimension_semantics<parallel>], iteration_bounds = array<i64: 1, 1>, scalar_prefetch = 0 : i64, scratch_operands = 0 : i64, tpu.core_type = #tpu.core_type<tc>, window_params = [{transform_indices = @transform_0, window_bounds = array<i64: 2, 4, 2, 128>}, {transform_indices = @transform_1, window_bounds = array<i64: 2, 4, 2, 128>}]} {
    %c0 = arith.constant 0 : index
    %c0_0 = arith.constant 0 : index
    %c0_1 = arith.constant 0 : index
    %c0_2 = arith.constant 0 : index
    %0 = vector.load %arg2[%c0, %c0_0, %c0_1, %c0_2] : memref<2x4x2x128xf32, #tpu.memory_space<vmem>>, vector<2x4x2x128xf32>
    %cst = arith.constant dense<0xFF800000> : vector<2x2x128xf32>
    %1 = vector.multi_reduction <maximumf>, %0, %cst [1] : vector<2x4x2x128xf32> to vector<2x2x128xf32>
    %2 = vector.shape_cast %1 : vector<2x2x128xf32> to vector<2x1x2x128xf32>
    %3 = vector.broadcast %2 : vector<2x1x2x128xf32> to vector<2x4x2x128xf32>
    %4 = arith.subf %0, %3 : vector<2x4x2x128xf32>
    %5 = math.exp %4 : vector<2x4x2x128xf32>
    %cst_3 = arith.constant dense<0.000000e+00> : vector<2x2x128xf32>
    %6 = vector.multi_reduction <add>, %5, %cst_3 [1] : vector<2x4x2x128xf32> to vector<2x2x128xf32>
    %7 = vector.shape_cast %6 : vector<2x2x128xf32> to vector<2x1x2x128xf32>
    %8 = vector.broadcast %7 : vector<2x1x2x128xf32> to vector<2x4x2x128xf32>
    %9 = arith.divf %5, %8 : vector<2x4x2x128xf32>
    %c0_4 = arith.constant 0 : index
    %c0_5 = arith.constant 0 : index
    %c0_6 = arith.constant 0 : index
    %c0_7 = arith.constant 0 : index
    %10 = vector.load %arg3[%c0_4, %c0_5, %c0_6, %c0_7] : memref<2x4x2x128xf32, #tpu.memory_space<vmem>>, vector<2x4x2x128xf32>
    tpu.vector_store %arg3[%c0_4, %c0_5, %c0_6, %c0_7], %9 {strides = array<i32>} : memref<2x4x2x128xf32, #tpu.memory_space<vmem>>, vector<2x4x2x128xf32>,
    return
  }
  func.func @transform_0(%arg0: i32, %arg1: i32) -> (i32, i32, i32, i32) {
    %c0_i32 = arith.constant 0 : i32
    %c0_i32_0 = arith.constant 0 : i32
    %c0_i32_1 = arith.constant 0 : i32
    return %arg0, %c0_i32, %arg1, %c0_i32_0 : i32, i32, i32, i32
  }
  func.func @transform_1(%arg0: i32, %arg1: i32) -> (i32, i32, i32, i32) {
    %c0_i32 = arith.constant 0 : i32
    %c0_i32_0 = arith.constant 0 : i32
    %c0_i32_1 = arith.constant 0 : i32
    return %arg0, %c0_i32, %arg1, %c0_i32_0 : i32, i32, i32, i32
  }
}

</mosaic_0001>

<llo_original>
// kernel: tpu_custom_call.1
$region0: #{tpu_custom_call.1}
  #allocation0 [shape = 'u32[]', space=smem, size = 0x4, offset = 0x4, fixed_abs, tag = 'smem constant byte address 0x4 - core index']
  #allocation1 [shape = 'u32[144,128]{1,0:T(1,128)}', space=vmem, size = 0x12000, scoped, tag = 'internal scratch']
  %s0 = inlined_call_operand.hbm [shape: f32[2,4,2,128], index: 0, kind: input, shape index: {}]
  %s1 = inlined_call_operand.hbm [shape: f32[2,4,2,128], index: 1, kind: output, shape index: {}]
  %s2 = sld [smem:[#allocation0]]
  $region18: #{tpu_custom_call.1} parent=0
    _
  %s4 = ssub.s32 1, %s2
  %s5 = scalar_select 0, %s4, %s2
  $region1: #{tpu_custom_call.1} parent=0
    #allocation2 [shape = 'u8[8192]{0}', space=vmem, size = 0x2000, scoped, tag = 'input window, operand 0, single buffered']
    #allocation3 [shape = 's32[1]{0}', space=sflag, size = 0x4, scoped, tag = 'scoped memory for tpu_custom_call.1']
    #allocation4 [shape = 's32[1]{0}', space=sflag, size = 0x4, scoped, tag = 'scoped memory for tpu_custom_call.1']
    #allocation5 [shape = 'u8[8192]{0}', space=vmem, size = 0x2000, scoped, tag = 'output window, operand 0, single buffered']
    %6 = vsyncpa [#allocation3], 0
    %7 = vsyncpa [#allocation4], 0
    // Predicated region
    $region2: #{tpu_custom_call.1} parent=1 // pred_check
      _
    $region3: #{tpu_custom_call.1} parent=1 // pred_check_branch
      %9 = sbr.rel (0) target = $region5
    $region4: #{tpu_custom_call.1} parent=1 // pred_region
      %s11 = ssub.s32 256, 256
      %12 = vsyncadd [#allocation3], %s11
      %s13 = sshll.u32 [#allocation2], 4
      %s14 = int_to_ptr.vmem [resolvable:$true] %s13
      %19 = dma.hbm_to_vmem [thread:$0]  %s0, 256, %s14, [#allocation3], 32, 32, 2
    $region5: #{tpu_custom_call.1} parent=1 // pred_fallthru
      _
    // Predicated region
    $region6: #{tpu_custom_call.1} parent=1 // pred_check
      _
    $region7: #{tpu_custom_call.1} parent=1 // pred_check_branch
      %21 = sbr.rel (0) target = $region9
    $region8: #{tpu_custom_call.1} parent=1 // pred_region
      %22 = dma.done [#allocation3], 256
    $region9: #{tpu_custom_call.1} parent=1 // pred_fallthru
      _
    %v23 = vld [vmem:[#allocation2] sm:$0x3]
    %v24 = vld [vmem:[#allocation2 + $0x2] sm:$0x3]
    %v25 = vld [vmem:[#allocation2 + $0x4] sm:$0x3]
    %v26 = vld [vmem:[#allocation2 + $0x6] sm:$0x3]
    %v27 = vld [vmem:[#allocation2 + $0x8] sm:$0x3]
    %v28 = vld [vmem:[#allocation2 + $0xa] sm:$0x3]
    %v29 = vld [vmem:[#allocation2 + $0xc] sm:$0x3]
    %v30 = vld [vmem:[#allocation2 + $0xe] sm:$0x3]
    %vm31 = vcmask 1041408
    %v32 = vsel %vm31, %v23, -inf
    %v33 = vsel %vm31, %v24, -inf
    %v34 = vsel %vm31, %v25, -inf
    %v35 = vmax.f32 %v32, %v34
    %v36 = vsel %vm31, %v26, -inf
    %v37 = vmax.f32 %v33, %v36
    %v38 = vmax.f32 %v35, %v37
    %v39 = vsel %vm31, %v27, -inf
    %v40 = vsel %vm31, %v28, -inf
    %v41 = vsel %vm31, %v29, -inf
    %v42 = vmax.f32 %v39, %v41
    %v43 = vsel %vm31, %v30, -inf
    %v44 = vmax.f32 %v40, %v43
    %v45 = vmax.f32 %v42, %v44
    %v46 = vsub.f32 %v23, %v38
    %v47 = vsub.f32 %v24, %v38
    %v48 = vsub.f32 %v25, %v38
    %v49 = vsub.f32 %v26, %v38
    %v50 = vsub.f32 %v27, %v45
    %v51 = vsub.f32 %v28, %v45
    %v52 = vsub.f32 %v29, %v45
    %v53 = vsub.f32 %v30, %v45
    %v54 = vmul.f32 %v46, 1.442695
    %v55 = vpow.pop %v54
    %v56 = vmul.f32 %v47, 1.442695
    %v57 = vpow.pop %v56
    %v58 = vmul.f32 %v48, 1.442695
    %v59 = vpow.pop %v58
    %v60 = vmul.f32 %v49, 1.442695
    %v61 = vpow.pop %v60
    %v62 = vmul.f32 %v50, 1.442695
    %v63 = vpow.pop %v62
    %v64 = vmul.f32 %v51, 1.442695
    %v65 = vpow.pop %v64
    %v66 = vmul.f32 %v52, 1.442695
    %v67 = vpow.pop %v66
    %v68 = vmul.f32 %v53, 1.442695
    %v69 = vpow.pop %v68
    %v70 = vsel %vm31, %v55, 0.0
    %v71 = vsel %vm31, %v57, 0.0
    %v72 = vadd.f32 %v70, %v71
    %v73 = vsel %vm31, %v59, 0.0
    %v74 = vadd.f32 %v72, %v73
    %v75 = vsel %vm31, %v61, 0.0
    %v76 = vadd.f32 %v74, %v75
    %v77 = vsel %vm31, %v63, 0.0
    %v78 = vsel %vm31, %v65, 0.0
    %v79 = vadd.f32 %v77, %v78
    %v80 = vsel %vm31, %v67, 0.0
    %v81 = vadd.f32 %v79, %v80
    %v82 = vsel %vm31, %v69, 0.0
    %v83 = vadd.f32 %v81, %v82
    %v84 = vrcp.pop %v76
    %v85 = vmul.f32 %v55, %v84
    %v86 = vmul.f32 %v57, %v84
    %v87 = vmul.f32 %v59, %v84
    %v88 = vmul.f32 %v61, %v84
    %v89 = vrcp.pop %v83
    %v90 = vmul.f32 %v63, %v89
    %v91 = vmul.f32 %v65, %v89
    %v92 = vmul.f32 %v67, %v89
    %v93 = vmul.f32 %v69, %v89
    %94 = vst [vmem:[#allocation5] sm:$0x3] %v85
    %95 = vst [vmem:[#allocation5 + $0x2] sm:$0x3] %v86
    %96 = vst [vmem:[#allocation5 + $0x4] sm:$0x3] %v87
    %97 = vst [vmem:[#allocation5 + $0x6] sm:$0x3] %v88
    %98 = vst [vmem:[#allocation5 + $0x8] sm:$0x3] %v90
    %99 = vst [vmem:[#allocation5 + $0xa] sm:$0x3] %v91
    %100 = vst [vmem:[#allocation5 + $0xc] sm:$0x3] %v92
    %101 = vst [vmem:[#allocation5 + $0xe] sm:$0x3] %v93
    // Predicated region
    $region10: #{tpu_custom_call.1} parent=1 // pred_check
      _
    $region11: #{tpu_custom_call.1} parent=1 // pred_check_branch
      %103 = sbr.rel (0) target = $region13
    $region12: #{tpu_custom_call.1} parent=1 // pred_region
      %s105 = ssub.s32 256, 256
      %106 = vsyncadd [#allocation4], %s105
      %s107 = sshll.u32 [#allocation5], 4
      %s108 = int_to_ptr.vmem [resolvable:$true] %s107
      %113 = dma.vmem_to_hbm [thread:$0]  %s108, 256, %s1, [#allocation4], 32, 32, 2
    $region13: #{tpu_custom_call.1} parent=1 // pred_fallthru
      _
    // Predicated region
    $region14: #{tpu_custom_call.1} parent=1 // pred_check
      _
    $region15: #{tpu_custom_call.1} parent=1 // pred_check_branch
      %115 = sbr.rel (0) target = $region17
    $region16: #{tpu_custom_call.1} parent=1 // pred_region
      %116 = dma.done [#allocation4], 256
    $region17: #{tpu_custom_call.1} parent=1 // pred_fallthru
      _
    %117 = vsyncpa [#allocation3], 1
    %118 = vsyncpa [#allocation4], 1

</llo_original>
